<compile_context>
chip_gen: v7x
topology: tpu7x:2x2x1
jax: 0.10.0
libtpu: 0.0.40
codegen_flags: <defaults>
</compile_context>

<pallas_src>
import functools

import jax
import jax.numpy as jnp
from jax.experimental import pallas as pl
from jax.experimental.pallas import tpu as pltpu

EPS = 1e-6


# ---------------------------------------------------------------- kernel ----

def _sublayer_ffn_kernel(x_ref, a2_ref, b2_ref, w1_ref, bw1_ref, w2_ref, bw2_ref,
                         *rest, dropout_p, keep_threshold):
    """Fused: LayerNorm -> Linear -> ReLU -> Linear -> dropout -> + residual.

    Operates on one [TM, D] row tile per grid step. Weights are resident in
    VMEM (constant-index BlockSpecs). `rest` is (bits_ref, o_ref) when dropout
    is active, otherwise (o_ref,).
    """
    if dropout_p > 0.0:
        bits_ref, o_ref = rest
    else:
        (o_ref,) = rest

    x = x_ref[...].astype(jnp.float32)
    d = x.shape[-1]

    # --- LayerNorm (repo semantics: unbiased std, eps added to std) --------
    mean = jnp.mean(x, axis=-1, keepdims=True)
    diff = x - mean
    var = jnp.sum(diff * diff, axis=-1, keepdims=True) * (1.0 / (d - 1))
    inv_std = 1.0 / (jnp.sqrt(var) + EPS)          # one divide per row
    normed = (a2_ref[...].astype(jnp.float32) * (diff * inv_std)
              + b2_ref[...].astype(jnp.float32))

    # --- FeedForward sublayer: MXU matmuls, bf16 inputs, f32 accumulate ----
    h = jnp.dot(normed.astype(w1_ref.dtype), w1_ref[...],
                preferred_element_type=jnp.float32)
    h = jnp.maximum(h + bw1_ref[...].astype(jnp.float32), 0.0)
    y = jnp.dot(h.astype(w2_ref.dtype), w2_ref[...],
                preferred_element_type=jnp.float32)
    y = y + bw2_ref[...].astype(jnp.float32)

    # --- Inverted dropout: integer threshold, constant 1/(1-p) scale -------
    if dropout_p > 0.0:
        keep = bits_ref[...] >= jnp.int32(keep_threshold)
        y = jnp.where(keep, y * jnp.float32(1.0 / (1.0 - dropout_p)), 0.0)

    # --- Residual add -------------------------------------------------------
    o_ref[...] = (x + y).astype(o_ref.dtype)


# --------------------------------------------------------------- wrapper ----

def sublayer_connection_ffn(x, ln_a2, ln_b2, w1, b1, w2, b2, *,
                            dropout_p=0.0, rng_key=None, block_rows=128):
    """x: [B, S, D]. Returns x + dropout(FFN(LayerNorm(x))) as one fused kernel."""
    B, S, D = x.shape
    F = w1.shape[1]
    R = B * S
    x2d = x.reshape(R, D)

    # Row tile: 128 rows when it divides R, otherwise whole extent (small demo).
    tm = block_rows if (R >= block_rows and R % block_rows == 0) else R
    grid = (R // tm,)

    row_spec = pl.BlockSpec((tm, D), lambda i: (i, 0))
    resident = lambda shape: pl.BlockSpec(shape, lambda i: (0, 0))

    inputs = [x2d, ln_a2, ln_b2, w1, b1, w2, b2]
    in_specs = [row_spec,
                resident((1, D)), resident((1, D)),
                resident((D, F)), resident((1, F)),
                resident((F, D)), resident((1, D))]

    keep_threshold = 0
    if dropout_p > 0.0:
        if rng_key is None:
            raise ValueError("rng_key is required when dropout_p > 0")
        # Uniform 32-bit randoms generated once over the whole [R, D] array
        # (no per-tile repeated mask), reinterpreted as int32 for a cheap
        # signed compare in-kernel:  P(bits >= t) == 1 - p.
        bits = jax.lax.bitcast_convert_type(
            jax.random.bits(rng_key, (R, D), dtype=jnp.uint32), jnp.int32)
        inputs.append(bits)
        in_specs.append(pl.BlockSpec((tm, D), lambda i: (i, 0)))
        keep_threshold = min(int(round(dropout_p * (1 << 32))) - (1 << 31),
                             (1 << 31) - 1)

    kernel = functools.partial(_sublayer_ffn_kernel,
                               dropout_p=float(dropout_p),
                               keep_threshold=keep_threshold)

    wbytes = jnp.dtype(w1.dtype).itemsize
    cost = pl.CostEstimate(
        flops=4 * R * D * F,
        transcendentals=0,
        bytes_accessed=(2 * R * D * 4                       # x read + out write
                        + (R * D * 4 if dropout_p > 0.0 else 0)   # dropout bits
                        + 2 * D * F * wbytes),               # resident weights
    )

    out2d = pl.pallas_call(
        kernel,
        out_shape=jax.ShapeDtypeStruct((R, D), x.dtype),
        grid=grid,
        in_specs=in_specs,
        out_specs=row_spec,
        compiler_params=pltpu.CompilerParams(
            dimension_semantics=("parallel",),
            vmem_limit_bytes=32 * 1024 * 1024),
        cost_estimate=cost,
    )(*inputs)
    return out2d.reshape(B, S, D)


# ------------------------------------------------------------------- main ---

if __name__ == "__main__":
    # Lane-dense shapes: D and F are multiples of 128; R = B*S = 256 -> 2 row tiles.
    B, S, D, F = 2, 128, 128, 256
    DROPOUT_P = 0.1

    key = jax.random.PRNGKey(0)
    kx, kw1, kw2, kdrop = jax.random.split(key, 4)

    x = jax.random.normal(kx, (B, S, D), dtype=jnp.float32)

    # LayerNorm(size) parameters: a_2 = ones(size), b_2 = zeros(size)
    ln_a2 = jnp.ones((1, D), dtype=jnp.float32)
    ln_b2 = jnp.zeros((1, D), dtype=jnp.float32)

    # FeedForward weights in bf16 (MXU inputs); biases stay f32 for the epilogue.
    w1 = (jax.random.normal(kw1, (D, F), dtype=jnp.float32) * 0.05).astype(jnp.bfloat16)
    b1 = jnp.zeros((1, F), dtype=jnp.float32)
    w2 = (jax.random.normal(kw2, (F, D), dtype=jnp.float32) * 0.05).astype(jnp.bfloat16)
    b2 = jnp.zeros((1, D), dtype=jnp.float32)

    out = sublayer_connection_ffn(x, ln_a2, ln_b2, w1, b1, w2, b2,
                                  dropout_p=DROPOUT_P, rng_key=kdrop)
    out = jax.block_until_ready(out)

    assert out.shape == (B, S, D) and out.dtype == jnp.float32
    assert bool(jnp.all(jnp.isfinite(out)))
    print("KERNEL_OK")
</pallas_src>

<mosaic_0001>
module attributes {stable_mosaic.version = 11 : i64} {
  func.func @_sublayer_ffn_kernel(%arg0: i32, %arg1: memref<128x128xf32, #tpu.memory_space<vmem>>, %arg2: memref<1x128xf32, #tpu.memory_space<vmem>>, %arg3: memref<1x128xf32, #tpu.memory_space<vmem>>, %arg4: memref<128x256xbf16, #tpu.memory_space<vmem>>, %arg5: memref<1x256xf32, #tpu.memory_space<vmem>>, %arg6: memref<256x128xbf16, #tpu.memory_space<vmem>>, %arg7: memref<1x128xf32, #tpu.memory_space<vmem>>, %arg8: memref<128x128xi32, #tpu.memory_space<vmem>>, %arg9: memref<128x128xf32, #tpu.memory_space<vmem>>) attributes {dimension_semantics = [#tpu.dimension_semantics<parallel>], iteration_bounds = array<i64: 2>, scalar_prefetch = 0 : i64, scratch_operands = 0 : i64, tpu.core_type = #tpu.core_type<tc>, window_params = [{transform_indices = @transform_0, window_bounds = array<i64: 128, 128>}, {pipeline_mode = #tpu.pipeline_mode<synchronous>, transform_indices = @transform_1, window_bounds = array<i64: 1, 128>}, {pipeline_mode = #tpu.pipeline_mode<synchronous>, transform_indices = @transform_2, window_bounds = array<i64: 1, 128>}, {pipeline_mode = #tpu.pipeline_mode<synchronous>, transform_indices = @transform_3, window_bounds = array<i64: 128, 256>}, {pipeline_mode = #tpu.pipeline_mode<synchronous>, transform_indices = @transform_4, window_bounds = array<i64: 1, 256>}, {pipeline_mode = #tpu.pipeline_mode<synchronous>, transform_indices = @transform_5, window_bounds = array<i64: 256, 128>}, {pipeline_mode = #tpu.pipeline_mode<synchronous>, transform_indices = @transform_6, window_bounds = array<i64: 1, 128>}, {transform_indices = @transform_7, window_bounds = array<i64: 128, 128>}, {transform_indices = @transform_8, window_bounds = array<i64: 128, 128>}]} {
    %c0 = arith.constant 0 : index
    %c0_0 = arith.constant 0 : index
    %0 = vector.load %arg1[%c0, %c0_0] : memref<128x128xf32, #tpu.memory_space<vmem>>, vector<128x128xf32>
    %cst = arith.constant dense<0.000000e+00> : vector<128xf32>
    %1 = vector.multi_reduction <add>, %0, %cst [1] : vector<128x128xf32> to vector<128xf32>
    %2 = vector.shape_cast %1 : vector<128xf32> to vector<128x1xf32>
    %cst_1 = arith.constant 1.280000e+02 : f32
    %3 = vector.broadcast %cst_1 : f32 to vector<128x1xf32>
    %4 = arith.divf %2, %3 : vector<128x1xf32>
    %5 = vector.broadcast %4 : vector<128x1xf32> to vector<128x128xf32>
    %6 = arith.subf %0, %5 : vector<128x128xf32>
    %7 = arith.mulf %6, %6 : vector<128x128xf32>
    %cst_2 = arith.constant dense<0.000000e+00> : vector<128xf32>
    %8 = vector.multi_reduction <add>, %7, %cst_2 [1] : vector<128x128xf32> to vector<128xf32>
    %9 = vector.shape_cast %8 : vector<128xf32> to vector<128x1xf32>
    %cst_3 = arith.constant 0.00787401571 : f32
    %10 = vector.broadcast %cst_3 : f32 to vector<128x1xf32>
    %11 = arith.mulf %9, %10 : vector<128x1xf32>
    %12 = math.sqrt %11 : vector<128x1xf32>
    %cst_4 = arith.constant 9.99999997E-7 : f32
    %13 = vector.broadcast %cst_4 : f32 to vector<128x1xf32>
    %14 = arith.addf %12, %13 : vector<128x1xf32>
    %cst_5 = arith.constant 1.000000e+00 : f32
    %15 = vector.broadcast %cst_5 : f32 to vector<128x1xf32>
    %16 = arith.divf %15, %14 : vector<128x1xf32>
    %c0_6 = arith.constant 0 : index
    %c0_7 = arith.constant 0 : index
    %17 = vector.load %arg2[%c0_6, %c0_7] : memref<1x128xf32, #tpu.memory_space<vmem>>, vector<1x128xf32>
    %18 = vector.broadcast %16 : vector<128x1xf32> to vector<128x128xf32>
    %19 = arith.mulf %6, %18 : vector<128x128xf32>
    %20 = vector.broadcast %17 : vector<1x128xf32> to vector<128x128xf32>
    %21 = arith.mulf %20, %19 : vector<128x128xf32>
    %c0_8 = arith.constant 0 : index
    %c0_9 = arith.constant 0 : index
    %22 = vector.load %arg3[%c0_8, %c0_9] : memref<1x128xf32, #tpu.memory_space<vmem>>, vector<1x128xf32>
    %23 = vector.broadcast %22 : vector<1x128xf32> to vector<128x128xf32>
    %24 = arith.addf %21, %23 : vector<128x128xf32>
    %25 = arith.truncf %24 : vector<128x128xf32> to vector<128x128xbf16>
    %c0_10 = arith.constant 0 : index
    %c0_11 = arith.constant 0 : index
    %26 = vector.load %arg4[%c0_10, %c0_11] : memref<128x256xbf16, #tpu.memory_space<vmem>>, vector<128x256xbf16>
    %cst_12 = arith.constant dense<0.000000e+00> : vector<128x256xf32>
    %27 = tpu.matmul %25, %26, %cst_12 {dimension_numbers = #tpu.dot_dimension_numbers<[1], [0], [0], [1], [0, 0, 1, 1], [], []>} : vector<128x128xbf16>, vector<128x256xbf16>, vector<128x256xf32> -> vector<128x256xf32>
    %c0_13 = arith.constant 0 : index
    %c0_14 = arith.constant 0 : index
    %28 = vector.load %arg5[%c0_13, %c0_14] : memref<1x256xf32, #tpu.memory_space<vmem>>, vector<1x256xf32>
    %29 = vector.broadcast %28 : vector<1x256xf32> to vector<128x256xf32>
    %30 = arith.addf %27, %29 : vector<128x256xf32>
    %cst_15 = arith.constant 0.000000e+00 : f32
    %31 = vector.broadcast %cst_15 : f32 to vector<128x256xf32>
    %32 = arith.maximumf %30, %31 : vector<128x256xf32>
    %33 = arith.truncf %32 : vector<128x256xf32> to vector<128x256xbf16>
    %c0_16 = arith.constant 0 : index
    %c0_17 = arith.constant 0 : index
    %34 = vector.load %arg6[%c0_16, %c0_17] : memref<256x128xbf16, #tpu.memory_space<vmem>>, vector<256x128xbf16>
    %cst_18 = arith.constant dense<0.000000e+00> : vector<128x128xf32>
    %35 = tpu.matmul %33, %34, %cst_18 {dimension_numbers = #tpu.dot_dimension_numbers<[1], [0], [0], [1], [0, 0, 1, 1], [], []>} : vector<128x256xbf16>, vector<256x128xbf16>, vector<128x128xf32> -> vector<128x128xf32>
    %c0_19 = arith.constant 0 : index
    %c0_20 = arith.constant 0 : index
    %36 = vector.load %arg7[%c0_19, %c0_20] : memref<1x128xf32, #tpu.memory_space<vmem>>, vector<1x128xf32>
    %37 = vector.broadcast %36 : vector<1x128xf32> to vector<128x128xf32>
    %38 = arith.addf %35, %37 : vector<128x128xf32>
    %c0_21 = arith.constant 0 : index
    %c0_22 = arith.constant 0 : index
    %39 = vector.load %arg8[%c0_21, %c0_22] : memref<128x128xi32, #tpu.memory_space<vmem>>, vector<128x128xi32>
    %c-1717986918_i32 = arith.constant -1717986918 : i32
    %40 = vector.broadcast %c-1717986918_i32 : i32 to vector<128x128xi32>
    %41 = arith.cmpi sge, %39, %40 : vector<128x128xi32>
    %cst_23 = arith.constant 1.11111116 : f32
    %42 = vector.broadcast %cst_23 : f32 to vector<128x128xf32>
    %43 = arith.mulf %38, %42 : vector<128x128xf32>
    %cst_24 = arith.constant 0.000000e+00 : f32
    %44 = vector.broadcast %cst_24 : f32 to vector<128x128xf32>
    %45 = arith.select %41, %43, %44 : vector<128x128xi1>, vector<128x128xf32>
    %46 = arith.addf %0, %45 : vector<128x128xf32>
    %c0_25 = arith.constant 0 : index
    %c0_26 = arith.constant 0 : index
    %47 = vector.load %arg9[%c0_25, %c0_26] : memref<128x128xf32, #tpu.memory_space<vmem>>, vector<128x128xf32>
    tpu.vector_store %arg9[%c0_25, %c0_26], %46 {strides = array<i32>} : memref<128x128xf32, #tpu.memory_space<vmem>>, vector<128x128xf32>,
    return
  }
  func.func @transform_0(%arg0: i32) -> (i32, i32) {
    %c0_i32 = arith.constant 0 : i32
    %c0_i32_0 = arith.constant 0 : i32
    return %arg0, %c0_i32 : i32, i32
  }
  func.func @transform_1(%arg0: i32) -> (i32, i32) {
    %c0_i32 = arith.constant 0 : i32
    %c0_i32_0 = arith.constant 0 : i32
    %c0_i32_1 = arith.constant 0 : i32
    return %c0_i32, %c0_i32_0 : i32, i32
  }
  func.func @transform_2(%arg0: i32) -> (i32, i32) {
    %c0_i32 = arith.constant 0 : i32
    %c0_i32_0 = arith.constant 0 : i32
    %c0_i32_1 = arith.constant 0 : i32
    return %c0_i32, %c0_i32_0 : i32, i32
  }
  func.func @transform_3(%arg0: i32) -> (i32, i32) {
    %c0_i32 = arith.constant 0 : i32
    %c0_i32_0 = arith.constant 0 : i32
    %c0_i32_1 = arith.constant 0 : i32
    return %c0_i32, %c0_i32_0 : i32, i32
  }
  func.func @transform_4(%arg0: i32) -> (i32, i32) {
    %c0_i32 = arith.constant 0 : i32
    %c0_i32_0 = arith.constant 0 : i32
    %c0_i32_1 = arith.constant 0 : i32
    return %c0_i32, %c0_i32_0 : i32, i32
  }
  func.func @transform_5(%arg0: i32) -> (i32, i32) {
    %c0_i32 = arith.constant 0 : i32
    %c0_i32_0 = arith.constant 0 : i32
    %c0_i32_1 = arith.constant 0 : i32
    return %c0_i32, %c0_i32_0 : i32, i32
  }
  func.func @transform_6(%arg0: i32) -> (i32, i32) {
    %c0_i32 = arith.constant 0 : i32
    %c0_i32_0 = arith.constant 0 : i32
    %c0_i32_1 = arith.constant 0 : i32
    return %c0_i32, %c0_i32_0 : i32, i32
  }
  func.func @transform_7(%arg0: i32) -> (i32, i32) {
    %c0_i32 = arith.constant 0 : i32
    %c0_i32_0 = arith.constant 0 : i32
    return %arg0, %c0_i32 : i32, i32
  }
  func.func @transform_8(%arg0: i32) -> (i32, i32) {
    %c0_i32 = arith.constant 0 : i32
    %c0_i32_0 = arith.constant 0 : i32
    return %arg0, %c0_i32 : i32, i32
  }
}

</mosaic_0001>

<llo_original>
// kernel: tpu_custom_call.1
$region0: #{tpu_custom_call.1}
  #allocation0 [shape = 'u32[]', space=smem, size = 0x4, offset = 0x4, fixed_abs, tag = 'smem constant byte address 0x4 - core index']
  #allocation1 [shape = 'u32[144,128]{1,0:T(1,128)}', space=vmem, size = 0x12000, scoped, tag = 'internal scratch']
  %s0 = inlined_call_operand.hbm [shape: f32[256,128], index: 0, kind: input, shape index: {}]
  %s1 = inlined_call_operand.vmem [shape: f32[1,128], index: 1, kind: input, shape index: {}]
  %s2 = inlined_call_operand.vmem [shape: f32[1,128], index: 2, kind: input, shape index: {}]
  %s3 = inlined_call_operand.hbm [shape: bf16[128,256], index: 3, kind: input, shape index: {}]
  %s4 = inlined_call_operand.vmem [shape: f32[1,256], index: 4, kind: input, shape index: {}]
  %s5 = inlined_call_operand.hbm [shape: bf16[256,128], index: 5, kind: input, shape index: {}]
  %s6 = inlined_call_operand.vmem [shape: f32[1,128], index: 6, kind: input, shape index: {}]
  %s7 = inlined_call_operand.hbm [shape: s32[256,128], index: 7, kind: input, shape index: {}]
  %s8 = inlined_call_operand.hbm [shape: f32[256,128], index: 8, kind: output, shape index: {}]
  %s9 = sld [smem:[#allocation0]]
  $region81: #{tpu_custom_call.1} parent=0
    _
  %s11 = ssub.s32 1, %s9
  %s12 = scalar_select 0, %s11, %s9
  $region1: #{tpu_custom_call.1} parent=0
    #allocation2 [shape = 'u8[131072]{0}', space=vmem, size = 0x20000, scoped, tag = 'input window, operand 0']
    #allocation3 [shape = 's32[2]{0}', space=sflag, size = 0x8, scoped, tag = 'scoped memory for tpu_custom_call.1']
    #allocation4 [shape = 's32[2]{0}', space=sflag, size = 0x8, scoped, tag = 'scoped memory for tpu_custom_call.1']
    #allocation5 [shape = 'u8[65536]{0}', space=vmem, size = 0x10000, scoped, tag = 'input window, operand 3, single buffered']
    #allocation6 [shape = 's32[1]{0}', space=sflag, size = 0x4, scoped, tag = 'scoped memory for tpu_custom_call.1']
    #allocation7 [shape = 'u8[65536]{0}', space=vmem, size = 0x10000, scoped, tag = 'input window, operand 5, single buffered']
    #allocation8 [shape = 'u8[131072]{0}', space=vmem, size = 0x20000, scoped, tag = 'input window, operand 7']
    #allocation9 [shape = 's32[2]{0}', space=sflag, size = 0x8, scoped, tag = 'scoped memory for tpu_custom_call.1']
    #allocation10 [shape = 'u8[131072]{0}', space=vmem, size = 0x20000, scoped, tag = 'output window, operand 0']
    %13 = vsyncpa [#allocation3], 0
    %s14 = scalar_lea.sflag [#allocation3], 1
    %15 = vsyncpa %s14, 0
    %16 = vsyncpa [#allocation6], 0
    %17 = vsyncpa [#allocation9], 0
    %s18 = scalar_lea.sflag [#allocation9], 1
    %19 = vsyncpa %s18, 0
    %20 = vsyncpa [#allocation4], 0
    %s21 = scalar_lea.sflag [#allocation4], 1
    %22 = vsyncpa %s21, 0
    loop: start=0, step=1, limit=4
    $region2: #{tpu_custom_call.1} parent=1 // loop_pre_header
      _
    $region3: #{tpu_custom_call.1} parent=1 // loop_header
      %s24 = sphi 0, %s28
      %p25 = scmp.ge.s32.totalorder %s24, 4
      %s34 = sphi 0, %s36
      %s37 = sphi 0, %s34
      %s38 = sphi 0, %s37
      %s54 = sphi 0, %s38
      %s58 = sphi 0, %s58
      %s60 = sphi 0, %s58
      %s61 = sphi 0, %s60
      %s75 = sphi 0, %s61
      %s79 = sphi 0, %s79
      %s81 = sphi 0, %s79
      %s82 = sphi 0, %s81
      %s96 = sphi 0, %s82
      %s100 = sphi 0, %s100
      %s102 = sphi 0, %s100
      %s103 = sphi 0, %s102
      %s117 = sphi 0, %s103
      %s121 = sphi 0, %s121
      %s123 = sphi 0, %s121
      %s124 = sphi 0, %s123
      %s138 = sphi 0, %s124
      %s142 = sphi 0, %s142
      %s144 = sphi 0, %s142
      %s145 = sphi 0, %s144
      %s159 = sphi 0, %s145
      %s163 = sphi 0, %s163
      %s165 = sphi 0, %s163
      %s166 = sphi 0, %s165
      %s180 = sphi 0, %s166
      %s186 = sphi 0, %s188
      %s189 = sphi 0, %s186
      %s190 = sphi 0, %s189
      %s206 = sphi 0, %s190
      %s212 = sphi 0, %s214
      %s215 = sphi 0, %s212
      %s216 = sphi 0, %s215
      %s232 = sphi 0, %s216
    $region4: #{tpu_custom_call.1} parent=1 // loop_header_branch
      %27 = sbr.rel (%p25) target = $region8
    $region5: #{tpu_custom_call.1} parent=1 // loop_body
      %s29 = ssub.s32 %s24, 1
      %s30 = ssub.s32 %s24, 2
      %s31 = sadd.s32 %s24, 1
      %s32 = ssub.s32 %s24, %s31
      %p33 = scmp.eq.s32.totalorder %s32, 0
      %s35 = sadd.s32 %s34, 1
      %s36 = scalar_select %p33, %s34, %s35
      %p39 = pneg %p33
      %p40 = scmp.eq.s32.totalorder %s24, 1
      %p41 = por %p39, %p40
      %p42 = scmp.ne.s32.totalorder %s34, %s37
      %p43 = scmp.eq.s32.totalorder %s24, 0
      %p44 = por %p42, %p43
      %p45 = scmp.ne.s32.totalorder %s34, %s37
      %p46 = scmp.eq.s32.totalorder %s29, 1
      %p47 = por %p45, %p46
      %p48 = scmp.ne.s32.totalorder %s37, %s38
      %p49 = scmp.eq.s32.totalorder %s29, 0
      %p50 = por %p48, %p49
      %p51 = scmp.ne.s32.totalorder %s37, %s38
      %p52 = scmp.eq.s32.totalorder %s30, 1
      %p53 = por %p51, %p52
      %p55 = scmp.ne.s32.totalorder %s38, %s54
      %p56 = scmp.eq.s32.totalorder %s30, 0
      %p57 = por %p55, %p56
      %s59 = sadd.s32 %s58, 1
      %p62 = scmp.eq.s32.totalorder %s24, 1
      %p63 = scmp.ne.s32.totalorder %s58, %s60
      %p64 = scmp.eq.s32.totalorder %s24, 0
      %p65 = por %p63, %p64
      %p66 = scmp.ne.s32.totalorder %s58, %s60
      %p67 = scmp.eq.s32.totalorder %s29, 1
      %p68 = por %p66, %p67
      %p69 = scmp.ne.s32.totalorder %s60, %s61
      %p70 = scmp.eq.s32.totalorder %s29, 0
      %p71 = por %p69, %p70
      %p72 = scmp.ne.s32.totalorder %s60, %s61
      %p73 = scmp.eq.s32.totalorder %s30, 1
      %p74 = por %p72, %p73
      %p76 = scmp.ne.s32.totalorder %s61, %s75
      %p77 = scmp.eq.s32.totalorder %s30, 0
      %p78 = por %p76, %p77
      %s80 = sadd.s32 %s79, 1
      %p83 = scmp.eq.s32.totalorder %s24, 1
      %p84 = scmp.ne.s32.totalorder %s79, %s81
      %p85 = scmp.eq.s32.totalorder %s24, 0
      %p86 = por %p84, %p85
      %p87 = scmp.ne.s32.totalorder %s79, %s81
      %p88 = scmp.eq.s32.totalorder %s29, 1
      %p89 = por %p87, %p88
      %p90 = scmp.ne.s32.totalorder %s81, %s82
      %p91 = scmp.eq.s32.totalorder %s29, 0
      %p92 = por %p90, %p91
      %p93 = scmp.ne.s32.totalorder %s81, %s82
      %p94 = scmp.eq.s32.totalorder %s30, 1
      %p95 = por %p93, %p94
      %p97 = scmp.ne.s32.totalorder %s82, %s96
      %p98 = scmp.eq.s32.totalorder %s30, 0
      %p99 = por %p97, %p98
      %s101 = sadd.s32 %s100, 1
      %p104 = scmp.eq.s32.totalorder %s24, 1
      %p105 = scmp.ne.s32.totalorder %s100, %s102
      %p106 = scmp.eq.s32.totalorder %s24, 0
      %p107 = por %p105, %p106
      %p108 = scmp.ne.s32.totalorder %s100, %s102
      %p109 = scmp.eq.s32.totalorder %s29, 1
      %p110 = por %p108, %p109
      %p111 = scmp.ne.s32.totalorder %s102, %s103
      %p112 = scmp.eq.s32.totalorder %s29, 0
      %p113 = por %p111, %p112
      %p114 = scmp.ne.s32.totalorder %s102, %s103
      %p115 = scmp.eq.s32.totalorder %s30, 1
      %p116 = por %p114, %p115
      %p118 = scmp.ne.s32.totalorder %s103, %s117
      %p119 = scmp.eq.s32.totalorder %s30, 0
      %p120 = por %p118, %p119
      %s122 = sadd.s32 %s121, 1
      %p125 = scmp.eq.s32.totalorder %s24, 1
      %p126 = scmp.ne.s32.totalorder %s121, %s123
      %p127 = scmp.eq.s32.totalorder %s24, 0
      %p128 = por %p126, %p127
      %p129 = scmp.ne.s32.totalorder %s121, %s123
      %p130 = scmp.eq.s32.totalorder %s29, 1
      %p131 = por %p129, %p130
      %p132 = scmp.ne.s32.totalorder %s123, %s124
      %p133 = scmp.eq.s32.totalorder %s29, 0
      %p134 = por %p132, %p133
      %p135 = scmp.ne.s32.totalorder %s123, %s124
      %p136 = scmp.eq.s32.totalorder %s30, 1
      %p137 = por %p135, %p136
      %p139 = scmp.ne.s32.totalorder %s124, %s138
      %p140 = scmp.eq.s32.totalorder %s30, 0
      %p141 = por %p139, %p140
      %s143 = sadd.s32 %s142, 1
      %p146 = scmp.eq.s32.totalorder %s24, 1
      %p147 = scmp.ne.s32.totalorder %s142, %s144
      %p148 = scmp.eq.s32.totalorder %s24, 0
      %p149 = por %p147, %p148
      %p150 = scmp.ne.s32.totalorder %s142, %s144
      %p151 = scmp.eq.s32.totalorder %s29, 1
      %p152 = por %p150, %p151
      %p153 = scmp.ne.s32.totalorder %s144, %s145
      %p154 = scmp.eq.s32.totalorder %s29, 0
      %p155 = por %p153, %p154
      %p156 = scmp.ne.s32.totalorder %s144, %s145
      %p157 = scmp.eq.s32.totalorder %s30, 1
      %p158 = por %p156, %p157
      %p160 = scmp.ne.s32.totalorder %s145, %s159
      %p161 = scmp.eq.s32.totalorder %s30, 0
      %p162 = por %p160, %p161
      %s164 = sadd.s32 %s163, 1
      %p167 = scmp.eq.s32.totalorder %s24, 1
      %p168 = scmp.ne.s32.totalorder %s163, %s165
      %p169 = scmp.eq.s32.totalorder %s24, 0
      %p170 = por %p168, %p169
      %p171 = scmp.ne.s32.totalorder %s163, %s165
      %p172 = scmp.eq.s32.totalorder %s29, 1
      %p173 = por %p171, %p172
      %p174 = scmp.ne.s32.totalorder %s165, %s166
      %p175 = scmp.eq.s32.totalorder %s29, 0
      %p176 = por %p174, %p175
      %p177 = scmp.ne.s32.totalorder %s165, %s166
      %p178 = scmp.eq.s32.totalorder %s30, 1
      %p179 = por %p177, %p178
      %p181 = scmp.ne.s32.totalorder %s166, %s180
      %p182 = scmp.eq.s32.totalorder %s30, 0
      %p183 = por %p181, %p182
      %s184 = ssub.s32 %s24, %s31
      %p185 = scmp.eq.s32.totalorder %s184, 0
      %s187 = sadd.s32 %s186, 1
      %s188 = scalar_select %p185, %s186, %s187
      %p191 = pneg %p185
      %p192 = scmp.eq.s32.totalorder %s24, 1
      %p193 = por %p191, %p192
      %p194 = scmp.ne.s32.totalorder %s186, %s189
      %p195 = scmp.eq.s32.totalorder %s24, 0
      %p196 = por %p194, %p195
      %p197 = scmp.ne.s32.totalorder %s186, %s189
      %p198 = scmp.eq.s32.totalorder %s29, 1
      %p199 = por %p197, %p198
      %p200 = scmp.ne.s32.totalorder %s189, %s190
      %p201 = scmp.eq.s32.totalorder %s29, 0
      %p202 = por %p200, %p201
      %p203 = scmp.ne.s32.totalorder %s189, %s190
      %p204 = scmp.eq.s32.totalorder %s30, 1
      %p205 = por %p203, %p204
      %p207 = scmp.ne.s32.totalorder %s190, %s206
      %p208 = scmp.eq.s32.totalorder %s30, 0
      %p209 = por %p207, %p208
      %s210 = ssub.s32 %s24, %s31
      %p211 = scmp.eq.s32.totalorder %s210, 0
      %s213 = sadd.s32 %s212, 1
      %s214 = scalar_select %p211, %s212, %s213
      %p217 = pneg %p211
      %p218 = scmp.eq.s32.totalorder %s24, 1
      %p219 = por %p217, %p218
      %p220 = scmp.ne.s32.totalorder %s212, %s215
      %p221 = scmp.eq.s32.totalorder %s24, 0
      %p222 = por %p220, %p221
      %p223 = scmp.ne.s32.totalorder %s212, %s215
      %p224 = scmp.eq.s32.totalorder %s29, 1
      %p225 = por %p223, %p224
      %p226 = scmp.ne.s32.totalorder %s215, %s216
      %p227 = scmp.eq.s32.totalorder %s29, 0
      %p228 = por %p226, %p227
      %p229 = scmp.ne.s32.totalorder %s215, %s216
      %p230 = scmp.eq.s32.totalorder %s30, 1
      %p231 = por %p229, %p230
      %p233 = scmp.ne.s32.totalorder %s216, %s232
      %p234 = scmp.eq.s32.totalorder %s30, 0
      %p235 = por %p233, %p234
      %p236 = scmp.le.s32.totalorder 1, %s24
      %p237 = scmp.lt.s32.totalorder %s24, 3
      %p238 = pnand %p236, %p237
      %p239 = pneg %p238
      // Predicated region
      $region9: #{tpu_custom_call.1} parent=5 // pred_check
        _
      $region10: #{tpu_custom_call.1} parent=5 // pred_check_branch
        %241 = sbr.rel (%p238) target = $region12
      $region11: #{tpu_custom_call.1} parent=5 // pred_region
        %s242 = ssub.s32 %s24, 1
        // Predicated region
        $region13: #{tpu_custom_call.1} parent=11 // pred_check
          %p243 = pneg %p71
        $region14: #{tpu_custom_call.1} parent=11 // pred_check_branch
          %245 = sbr.rel (%p243) target = $region16
        $region15: #{tpu_custom_call.1} parent=11 // pred_region
          _
        $region16: #{tpu_custom_call.1} parent=11 // pred_fallthru
          _
        // Predicated region
        $region17: #{tpu_custom_call.1} parent=11 // pred_check
          %p246 = pneg %p92
        $region18: #{tpu_custom_call.1} parent=11 // pred_check_branch
          %248 = sbr.rel (%p246) target = $region20
        $region19: #{tpu_custom_call.1} parent=11 // pred_region
          _
        $region20: #{tpu_custom_call.1} parent=11 // pred_fallthru
          _
        // Predicated region
        $region21: #{tpu_custom_call.1} parent=11 // pred_check
          %p249 = pneg %p113
        $region22: #{tpu_custom_call.1} parent=11 // pred_check_branch
          %251 = sbr.rel (%p249) target = $region24
        $region23: #{tpu_custom_call.1} parent=11 // pred_region
          %s253 = ssub.s32 2048, 2048
          %254 = vsyncadd [#allocation6], %s253
          %s255 = sshll.u32 [#allocation5], 4
          %s256 = int_to_ptr.vmem [resolvable:$true] %s255
          %261 = dma.hbm_to_vmem [thread:$0]  %s3, 2048, %s256, [#allocation6], 128, 128, 8
        $region24: #{tpu_custom_call.1} parent=11 // pred_fallthru
          _
        // Predicated region
        $region25: #{tpu_custom_call.1} parent=11 // pred_check
          %p262 = pneg %p134
        $region26: #{tpu_custom_call.1} parent=11 // pred_check_branch
          %264 = sbr.rel (%p262) target = $region28
        $region27: #{tpu_custom_call.1} parent=11 // pred_region
          _
        $region28: #{tpu_custom_call.1} parent=11 // pred_fallthru
          _
        // Predicated region
        $region29: #{tpu_custom_call.1} parent=11 // pred_check
          %p265 = pneg %p155
        $region30: #{tpu_custom_call.1} parent=11 // pred_check_branch
          %267 = sbr.rel (%p265) target = $region32
        $region31: #{tpu_custom_call.1} parent=11 // pred_region
          %s269 = ssub.s32 2048, 2048
          %270 = vsyncadd [#allocation6], %s269
          %s271 = sshll.u32 [#allocation7], 4
          %s272 = int_to_ptr.vmem [resolvable:$true] %s271
          %277 = dma.hbm_to_vmem [thread:$0]  %s5, 2048, %s272, [#allocation6], 64, 64, 4
        $region32: #{tpu_custom_call.1} parent=11 // pred_fallthru
          _
        // Predicated region
        $region33: #{tpu_custom_call.1} parent=11 // pred_check
          %p278 = pneg %p176
        $region34: #{tpu_custom_call.1} parent=11 // pred_check_branch
          %280 = sbr.rel (%p278) target = $region36
        $region35: #{tpu_custom_call.1} parent=11 // pred_region
          _
        $region36: #{tpu_custom_call.1} parent=11 // pred_fallthru
          _
      $region12: #{tpu_custom_call.1} parent=5 // pred_fallthru
        _
      %p281 = scmp.lt.s32.totalorder %s24, 2
      // Predicated region
      $region37: #{tpu_custom_call.1} parent=5 // pred_check
        %p282 = pneg %p281
      $region38: #{tpu_custom_call.1} parent=5 // pred_check_branch
        %284 = sbr.rel (%p282) target = $region40
      $region39: #{tpu_custom_call.1} parent=5 // pred_region
        // Predicated region
        $region41: #{tpu_custom_call.1} parent=39 // pred_check
          %p285 = pneg %p44
        $region42: #{tpu_custom_call.1} parent=39 // pred_check_branch
          %287 = sbr.rel (%p285) target = $region44
        $region43: #{tpu_custom_call.1} parent=39 // pred_region
          %s288 = sand.u32 %s34, 1
          %s289 = scalar_lea.sflag [#allocation3], %s288
          %s290 = sand.u32 %s34, 1
          %s291 = smul.addr %s290, 128
          %s292 = scalar_lea.vmem [#allocation2], %s291
          %s293 = smul.u32 16, %s24
          %s295 = ssub.s32 2048, 2048
          %296 = vsyncadd %s289, %s295
          %s297 = smul.addr %s293, 128
          %s298 = scalar_lea.hbm %s0, %s297
          %s299 = sshll.u32 %s292, 4
          %s300 = int_to_ptr.vmem [resolvable:$true] %s299
          %305 = dma.hbm_to_vmem [thread:$0]  %s298, 2048, %s300, %s289, 128, 128, 8
        $region44: #{tpu_custom_call.1} parent=39 // pred_fallthru
          _
        // Predicated region
        $region45: #{tpu_custom_call.1} parent=39 // pred_check
          %p306 = pneg %p196
        $region46: #{tpu_custom_call.1} parent=39 // pred_check_branch
          %308 = sbr.rel (%p306) target = $region48
        $region47: #{tpu_custom_call.1} parent=39 // pred_region
          %s309 = sand.u32 %s186, 1
          %s310 = scalar_lea.sflag [#allocation9], %s309
          %s311 = sand.u32 %s186, 1
          %s312 = smul.addr %s311, 128
          %s313 = scalar_lea.vmem [#allocation8], %s312
          %s314 = smul.u32 16, %s24
          %s316 = ssub.s32 2048, 2048
          %317 = vsyncadd %s310, %s316
          %s318 = smul.addr %s314, 128
          %s319 = scalar_lea.hbm %s7, %s318
          %s320 = sshll.u32 %s313, 4
          %s321 = int_to_ptr.vmem [resolvable:$true] %s320
          %326 = dma.hbm_to_vmem [thread:$0]  %s319, 2048, %s321, %s310, 128, 128, 8
        $region48: #{tpu_custom_call.1} parent=39 // pred_fallthru
          _
      $region40: #{tpu_custom_call.1} parent=5 // pred_fallthru
        _
      %p327 = scmp.le.s32.totalorder 1, %s24
      %p328 = scmp.lt.s32.totalorder %s24, 3
      %p329 = pnand %p327, %p328
      %p330 = pneg %p329
      // Predicated region
      $region49: #{tpu_custom_call.1} parent=5 // pred_check
        _
      $region50: #{tpu_custom_call.1} parent=5 // pred_check_branch
        %332 = sbr.rel (%p329) target = $region52
      $region51: #{tpu_custom_call.1} parent=5 // pred_region
        %s333 = ssub.s32 %s24, 1
        %s334 = sand.u32 %s37, 1
        %s335 = scalar_lea.sflag [#allocation3], %s334
        %s336 = sand.u32 %s37, 1
        %s337 = smul.addr %s336, 128
        %s338 = scalar_lea.vmem [#allocation2], %s337
        // Predicated region
        $region53: #{tpu_custom_call.1} parent=51 // pred_check
          %p339 = pneg %p50
        $region54: #{tpu_custom_call.1} parent=51 // pred_check_branch
          %341 = sbr.rel (%p339) target = $region56
        $region55: #{tpu_custom_call.1} parent=51 // pred_region
          %342 = dma.done %s335, 2048
        $region56: #{tpu_custom_call.1} parent=51 // pred_fallthru
          _
        // Predicated region
        $region57: #{tpu_custom_call.1} parent=51 // pred_check
          %p343 = pneg %p113
        $region58: #{tpu_custom_call.1} parent=51 // pred_check_branch
          %345 = sbr.rel (%p343) target = $region60
        $region59: #{tpu_custom_call.1} parent=51 // pred_region
          %346 = dma.done [#allocation6], 2048
        $region60: #{tpu_custom_call.1} parent=51 // pred_fallthru
          _
        // Predicated region
        $region61: #{tpu_custom_call.1} parent=51 // pred_check
          %p347 = pneg %p155
        $region62: #{tpu_custom_call.1} parent=51 // pred_check_branch
          %349 = sbr.rel (%p347) target = $region64
        $region63: #{tpu_custom_call.1} parent=51 // pred_region
          %350 = dma.done [#allocation6], 2048
        $region64: #{tpu_custom_call.1} parent=51 // pred_fallthru
          _
        %s351 = sand.u32 %s189, 1
        %s352 = scalar_lea.sflag [#allocation9], %s351
        %s353 = sand.u32 %s189, 1
        %s354 = smul.addr %s353, 128
        %s355 = scalar_lea.vmem [#allocation8], %s354
        // Predicated region
        $region65: #{tpu_custom_call.1} parent=51 // pred_check
          %p356 = pneg %p202
        $region66: #{tpu_custom_call.1} parent=51 // pred_check_branch
          %358 = sbr.rel (%p356) target = $region68
        $region67: #{tpu_custom_call.1} parent=51 // pred_region
          %359 = dma.done %s352, 2048
        $region68: #{tpu_custom_call.1} parent=51 // pred_fallthru
          _
        %s360 = sand.u32 %s37, 1
        %s361 = scalar_lea.sflag [#allocation3], %s360
        %s362 = sand.u32 %s37, 1
        %s363 = smul.addr %s362, 128
        %s364 = scalar_lea.vmem [#allocation2], %s363
        %p365 = pneg %p50
        %p366 = pneg %p47
        %p367 = pneg %p71
        %p368 = pneg %p68
        %p369 = pneg %p92
        %p370 = pneg %p89
        %p371 = pneg %p113
        %p372 = pneg %p110
        %p373 = pneg %p134
        %p374 = pneg %p131
        %p375 = pneg %p155
        %p376 = pneg %p152
        %p377 = pneg %p176
        %p378 = pneg %p173
        %s379 = sand.u32 %s189, 1
        %s380 = scalar_lea.sflag [#allocation9], %s379
        %s381 = sand.u32 %s189, 1
        %s382 = smul.addr %s381, 128
        %s383 = scalar_lea.vmem [#allocation8], %s382
        %p384 = pneg %p202
        %p385 = pneg %p199
        %p386 = pneg %p228
        %p387 = pneg %p225
        %s388 = sand.u32 %s215, 1
        %s389 = scalar_lea.sflag [#allocation4], %s388
        %s390 = sand.u32 %s215, 1
        %s391 = smul.addr %s390, 128
        %s392 = scalar_lea.vmem [#allocation10], %s391
        %s393 = smul.u32 16, %s29
        %s394 = smul.u32 16, %s29
        %s395 = smul.u32 16, %s29
        %v397 = vld [vmem:[%s338] sm:$0xff]
        %v398 = vld [vmem:[%s338 + $0x8] sm:$0xff]
        %v399 = vld [vmem:[%s338 + $0x10] sm:$0xff]
        %v400 = vld [vmem:[%s338 + $0x18] sm:$0xff]
        %v401 = vld [vmem:[%s338 + $0x20] sm:$0xff]
        %v402 = vld [vmem:[%s338 + $0x28] sm:$0xff]
        %v403 = vld [vmem:[%s338 + $0x30] sm:$0xff]
        %v404 = vld [vmem:[%s338 + $0x38] sm:$0xff]
        %v405 = vld [vmem:[%s338 + $0x40] sm:$0xff]
        %v406 = vld [vmem:[%s338 + $0x48] sm:$0xff]
        %v407 = vld [vmem:[%s338 + $0x50] sm:$0xff]
        %v408 = vld [vmem:[%s338 + $0x58] sm:$0xff]
        %v409 = vld [vmem:[%s338 + $0x60] sm:$0xff]
        %v410 = vld [vmem:[%s338 + $0x68] sm:$0xff]
        %v411 = vld [vmem:[%s338 + $0x70] sm:$0xff]
        %v412 = vld [vmem:[%s338 + $0x78] sm:$0xff]
        %413 = vadd.xlane.f32.xlu0 %v397
        %v414 = vpop.xlane.xlu0 %413
        %415 = vadd.xlane.f32.xlu0 %v398
        %v416 = vpop.xlane.xlu0 %415
        %417 = vadd.xlane.f32.xlu0 %v399
        %v418 = vpop.xlane.xlu0 %417
        %419 = vadd.xlane.f32.xlu0 %v400
        %v420 = vpop.xlane.xlu0 %419
        %421 = vadd.xlane.f32.xlu0 %v401
        %v422 = vpop.xlane.xlu0 %421
        %423 = vadd.xlane.f32.xlu0 %v402
        %v424 = vpop.xlane.xlu0 %423
        %425 = vadd.xlane.f32.xlu0 %v403
        %v426 = vpop.xlane.xlu0 %425
        %427 = vadd.xlane.f32.xlu0 %v404
        %v428 = vpop.xlane.xlu0 %427
        %429 = vadd.xlane.f32.xlu0 %v405
        %v430 = vpop.xlane.xlu0 %429
        %431 = vadd.xlane.f32.xlu0 %v406
        %v432 = vpop.xlane.xlu0 %431
        %433 = vadd.xlane.f32.xlu0 %v407
        %v434 = vpop.xlane.xlu0 %433
        %435 = vadd.xlane.f32.xlu0 %v408
        %v436 = vpop.xlane.xlu0 %435
        %437 = vadd.xlane.f32.xlu0 %v409
        %v438 = vpop.xlane.xlu0 %437
        %439 = vadd.xlane.f32.xlu0 %v410
        %v440 = vpop.xlane.xlu0 %439
        %441 = vadd.xlane.f32.xlu0 %v411
        %v442 = vpop.xlane.xlu0 %441
        %443 = vadd.xlane.f32.xlu0 %v412
        %v444 = vpop.xlane.xlu0 %443
        %v445 = vrcp.pop 128.0
        %v446 = vmul.f32 %v414, %v445
        %v447 = vmul.f32 %v416, %v445
        %v448 = vmul.f32 %v418, %v445
        %v449 = vmul.f32 %v420, %v445
        %v450 = vmul.f32 %v422, %v445
        %v451 = vmul.f32 %v424, %v445
        %v452 = vmul.f32 %v426, %v445
        %v453 = vmul.f32 %v428, %v445
        %v454 = vmul.f32 %v430, %v445
        %v455 = vmul.f32 %v432, %v445
        %v456 = vmul.f32 %v434, %v445
        %v457 = vmul.f32 %v436, %v445
        %v458 = vmul.f32 %v438, %v445
        %v459 = vmul.f32 %v440, %v445
        %v460 = vmul.f32 %v442, %v445
        %v461 = vmul.f32 %v444, %v445
        %v462 = vsub.f32 %v397, %v446
        %v463 = vsub.f32 %v398, %v447
        %v464 = vsub.f32 %v399, %v448
        %v465 = vsub.f32 %v400, %v449
        %v466 = vsub.f32 %v401, %v450
        %v467 = vsub.f32 %v402, %v451
        %v468 = vsub.f32 %v403, %v452
        %v469 = vsub.f32 %v404, %v453
        %v470 = vsub.f32 %v405, %v454
        %v471 = vsub.f32 %v406, %v455
        %v472 = vsub.f32 %v407, %v456
        %v473 = vsub.f32 %v408, %v457
        %v474 = vsub.f32 %v409, %v458
        %v475 = vsub.f32 %v410, %v459
        %v476 = vsub.f32 %v411, %v460
        %v477 = vsub.f32 %v412, %v461
        %v478 = vmul.f32 %v462, %v462
        %v479 = vmul.f32 %v463, %v463
        %v480 = vmul.f32 %v464, %v464
        %v481 = vmul.f32 %v465, %v465
        %v482 = vmul.f32 %v466, %v466
        %v483 = vmul.f32 %v467, %v467
        %v484 = vmul.f32 %v468, %v468
        %v485 = vmul.f32 %v469, %v469
        %v486 = vmul.f32 %v470, %v470
        %v487 = vmul.f32 %v471, %v471
        %v488 = vmul.f32 %v472, %v472
        %v489 = vmul.f32 %v473, %v473
        %v490 = vmul.f32 %v474, %v474
        %v491 = vmul.f32 %v475, %v475
        %v492 = vmul.f32 %v476, %v476
        %v493 = vmul.f32 %v477, %v477
        %494 = vadd.xlane.f32.xlu0 %v478
        %v495 = vpop.xlane.xlu0 %494
        %496 = vadd.xlane.f32.xlu0 %v479
        %v497 = vpop.xlane.xlu0 %496
        %498 = vadd.xlane.f32.xlu0 %v480
        %v499 = vpop.xlane.xlu0 %498
        %500 = vadd.xlane.f32.xlu0 %v481
        %v501 = vpop.xlane.xlu0 %500
        %502 = vadd.xlane.f32.xlu0 %v482
        %v503 = vpop.xlane.xlu0 %502
        %504 = vadd.xlane.f32.xlu0 %v483
        %v505 = vpop.xlane.xlu0 %504
        %506 = vadd.xlane.f32.xlu0 %v484
        %v507 = vpop.xlane.xlu0 %506
        %508 = vadd.xlane.f32.xlu0 %v485
        %v509 = vpop.xlane.xlu0 %508
        %510 = vadd.xlane.f32.xlu0 %v486
        %v511 = vpop.xlane.xlu0 %510
        %512 = vadd.xlane.f32.xlu0 %v487
        %v513 = vpop.xlane.xlu0 %512
        %514 = vadd.xlane.f32.xlu0 %v488
        %v515 = vpop.xlane.xlu0 %514
        %516 = vadd.xlane.f32.xlu0 %v489
        %v517 = vpop.xlane.xlu0 %516
        %518 = vadd.xlane.f32.xlu0 %v490
        %v519 = vpop.xlane.xlu0 %518
        %520 = vadd.xlane.f32.xlu0 %v491
        %v521 = vpop.xlane.xlu0 %520
        %522 = vadd.xlane.f32.xlu0 %v492
        %v523 = vpop.xlane.xlu0 %522
        %524 = vadd.xlane.f32.xlu0 %v493
        %v525 = vpop.xlane.xlu0 %524
        %v526 = vmul.f32 %v495, 0.007874016
        %v527 = vmul.f32 %v497, 0.007874016
        %v528 = vmul.f32 %v499, 0.007874016
        %v529 = vmul.f32 %v501, 0.007874016
        %v530 = vmul.f32 %v503, 0.007874016
        %v531 = vmul.f32 %v505, 0.007874016
        %v532 = vmul.f32 %v507, 0.007874016
        %v533 = vmul.f32 %v509, 0.007874016
        %v534 = vmul.f32 %v511, 0.007874016
        %v535 = vmul.f32 %v513, 0.007874016
        %v536 = vmul.f32 %v515, 0.007874016
        %v537 = vmul.f32 %v517, 0.007874016
        %v538 = vmul.f32 %v519, 0.007874016
        %v539 = vmul.f32 %v521, 0.007874016
        %v540 = vmul.f32 %v523, 0.007874016
        %v541 = vmul.f32 %v525, 0.007874016
        %v542 = vrsqrt.pop %v526
        %v543 = vmul.f32 %v526, %v542
        %vm544 = vcmp.eq.f32.partialorder %v526, inf
        %v545 = vsel %vm544, %v526, %v543
        %vm546 = vcmp.eq.f32.partialorder %v526, 0.0
        %v547 = vand.u32 %v526, 2147483648
        %v548 = vsel %vm546, %v547, %v545
        %v549 = vrsqrt.pop %v527
        %v550 = vmul.f32 %v527, %v549
        %vm551 = vcmp.eq.f32.partialorder %v527, inf
        %v552 = vsel %vm551, %v527, %v550
        %vm553 = vcmp.eq.f32.partialorder %v527, 0.0
        %v554 = vand.u32 %v527, 2147483648
        %v555 = vsel %vm553, %v554, %v552
        %v556 = vrsqrt.pop %v528
        %v557 = vmul.f32 %v528, %v556
        %vm558 = vcmp.eq.f32.partialorder %v528, inf
        %v559 = vsel %vm558, %v528, %v557
        %vm560 = vcmp.eq.f32.partialorder %v528, 0.0
        %v561 = vand.u32 %v528, 2147483648
        %v562 = vsel %vm560, %v561, %v559
        %v563 = vrsqrt.pop %v529
        %v564 = vmul.f32 %v529, %v563
        %vm565 = vcmp.eq.f32.partialorder %v529, inf
        %v566 = vsel %vm565, %v529, %v564
        %vm567 = vcmp.eq.f32.partialorder %v529, 0.0
        %v568 = vand.u32 %v529, 2147483648
        %v569 = vsel %vm567, %v568, %v566
        %v570 = vrsqrt.pop %v530
        %v571 = vmul.f32 %v530, %v570
        %vm572 = vcmp.eq.f32.partialorder %v530, inf
        %v573 = vsel %vm572, %v530, %v571
        %vm574 = vcmp.eq.f32.partialorder %v530, 0.0
        %v575 = vand.u32 %v530, 2147483648
        %v576 = vsel %vm574, %v575, %v573
        %v577 = vrsqrt.pop %v531
        %v578 = vmul.f32 %v531, %v577
        %vm579 = vcmp.eq.f32.partialorder %v531, inf
        %v580 = vsel %vm579, %v531, %v578
        %vm581 = vcmp.eq.f32.partialorder %v531, 0.0
        %v582 = vand.u32 %v531, 2147483648
        %v583 = vsel %vm581, %v582, %v580
        %v584 = vrsqrt.pop %v532
        %v585 = vmul.f32 %v532, %v584
        %vm586 = vcmp.eq.f32.partialorder %v532, inf
        %v587 = vsel %vm586, %v532, %v585
        %vm588 = vcmp.eq.f32.partialorder %v532, 0.0
        %v589 = vand.u32 %v532, 2147483648
        %v590 = vsel %vm588, %v589, %v587
        %v591 = vrsqrt.pop %v533
        %v592 = vmul.f32 %v533, %v591
        %vm593 = vcmp.eq.f32.partialorder %v533, inf
        %v594 = vsel %vm593, %v533, %v592
        %vm595 = vcmp.eq.f32.partialorder %v533, 0.0
        %v596 = vand.u32 %v533, 2147483648
        %v597 = vsel %vm595, %v596, %v594
        %v598 = vrsqrt.pop %v534
        %v599 = vmul.f32 %v534, %v598
        %vm600 = vcmp.eq.f32.partialorder %v534, inf
        %v601 = vsel %vm600, %v534, %v599
        %vm602 = vcmp.eq.f32.partialorder %v534, 0.0
        %v603 = vand.u32 %v534, 2147483648
        %v604 = vsel %vm602, %v603, %v601
        %v605 = vrsqrt.pop %v535
        %v606 = vmul.f32 %v535, %v605
        %vm607 = vcmp.eq.f32.partialorder %v535, inf
        %v608 = vsel %vm607, %v535, %v606
        %vm609 = vcmp.eq.f32.partialorder %v535, 0.0
        %v610 = vand.u32 %v535, 2147483648
        %v611 = vsel %vm609, %v610, %v608
        %v612 = vrsqrt.pop %v536
        %v613 = vmul.f32 %v536, %v612
        %vm614 = vcmp.eq.f32.partialorder %v536, inf
        %v615 = vsel %vm614, %v536, %v613
        %vm616 = vcmp.eq.f32.partialorder %v536, 0.0
        %v617 = vand.u32 %v536, 2147483648
        %v618 = vsel %vm616, %v617, %v615
        %v619 = vrsqrt.pop %v537
        %v620 = vmul.f32 %v537, %v619
        %vm621 = vcmp.eq.f32.partialorder %v537, inf
        %v622 = vsel %vm621, %v537, %v620
        %vm623 = vcmp.eq.f32.partialorder %v537, 0.0
        %v624 = vand.u32 %v537, 2147483648
        %v625 = vsel %vm623, %v624, %v622
        %v626 = vrsqrt.pop %v538
        %v627 = vmul.f32 %v538, %v626
        %vm628 = vcmp.eq.f32.partialorder %v538, inf
        %v629 = vsel %vm628, %v538, %v627
        %vm630 = vcmp.eq.f32.partialorder %v538, 0.0
        %v631 = vand.u32 %v538, 2147483648
        %v632 = vsel %vm630, %v631, %v629
        %v633 = vrsqrt.pop %v539
        %v634 = vmul.f32 %v539, %v633
        %vm635 = vcmp.eq.f32.partialorder %v539, inf
        %v636 = vsel %vm635, %v539, %v634
        %vm637 = vcmp.eq.f32.partialorder %v539, 0.0
        %v638 = vand.u32 %v539, 2147483648
        %v639 = vsel %vm637, %v638, %v636
        %v640 = vrsqrt.pop %v540
        %v641 = vmul.f32 %v540, %v640
        %vm642 = vcmp.eq.f32.partialorder %v540, inf
        %v643 = vsel %vm642, %v540, %v641
        %vm644 = vcmp.eq.f32.partialorder %v540, 0.0
        %v645 = vand.u32 %v540, 2147483648
        %v646 = vsel %vm644, %v645, %v643
        %v647 = vrsqrt.pop %v541
        %v648 = vmul.f32 %v541, %v647
        %vm649 = vcmp.eq.f32.partialorder %v541, inf
        %v650 = vsel %vm649, %v541, %v648
        %vm651 = vcmp.eq.f32.partialorder %v541, 0.0
        %v652 = vand.u32 %v541, 2147483648
        %v653 = vsel %vm651, %v652, %v650
        %v654 = vadd.f32 %v548, 1e-06
        %v655 = vadd.f32 %v555, 1e-06
        %v656 = vadd.f32 %v562, 1e-06
        %v657 = vadd.f32 %v569, 1e-06
        %v658 = vadd.f32 %v576, 1e-06
        %v659 = vadd.f32 %v583, 1e-06
        %v660 = vadd.f32 %v590, 1e-06
        %v661 = vadd.f32 %v597, 1e-06
        %v662 = vadd.f32 %v604, 1e-06
        %v663 = vadd.f32 %v611, 1e-06
        %v664 = vadd.f32 %v618, 1e-06
        %v665 = vadd.f32 %v625, 1e-06
        %v666 = vadd.f32 %v632, 1e-06
        %v667 = vadd.f32 %v639, 1e-06
        %v668 = vadd.f32 %v646, 1e-06
        %v669 = vadd.f32 %v653, 1e-06
        %v670 = vrcp.pop %v654
        %v671 = vmul.f32 1.0, %v670
        %v672 = vrcp.pop %v655
        %v673 = vmul.f32 1.0, %v672
        %v674 = vrcp.pop %v656
        %v675 = vmul.f32 1.0, %v674
        %v676 = vrcp.pop %v657
        %v677 = vmul.f32 1.0, %v676
        %v678 = vrcp.pop %v658
        %v679 = vmul.f32 1.0, %v678
        %v680 = vrcp.pop %v659
        %v681 = vmul.f32 1.0, %v680
        %v682 = vrcp.pop %v660
        %v683 = vmul.f32 1.0, %v682
        %v684 = vrcp.pop %v661
        %v685 = vmul.f32 1.0, %v684
        %v686 = vrcp.pop %v662
        %v687 = vmul.f32 1.0, %v686
        %v688 = vrcp.pop %v663
        %v689 = vmul.f32 1.0, %v688
        %v690 = vrcp.pop %v664
        %v691 = vmul.f32 1.0, %v690
        %v692 = vrcp.pop %v665
        %v693 = vmul.f32 1.0, %v692
        %v694 = vrcp.pop %v666
        %v695 = vmul.f32 1.0, %v694
        %v696 = vrcp.pop %v667
        %v697 = vmul.f32 1.0, %v696
        %v698 = vrcp.pop %v668
        %v699 = vmul.f32 1.0, %v698
        %v700 = vrcp.pop %v669
        %v701 = vmul.f32 1.0, %v700
        %v702 = vld [vmem:[%s1] sm:$0x1]
        %v703 = vmul.f32 %v462, %v671
        %v704 = vmul.f32 %v463, %v673
        %v705 = vmul.f32 %v464, %v675
        %v706 = vmul.f32 %v465, %v677
        %v707 = vmul.f32 %v466, %v679
        %v708 = vmul.f32 %v467, %v681
        %v709 = vmul.f32 %v468, %v683
        %v710 = vmul.f32 %v469, %v685
        %v711 = vmul.f32 %v470, %v687
        %v712 = vmul.f32 %v471, %v689
        %v713 = vmul.f32 %v472, %v691
        %v714 = vmul.f32 %v473, %v693
        %v715 = vmul.f32 %v474, %v695
        %v716 = vmul.f32 %v475, %v697
        %v717 = vmul.f32 %v476, %v699
        %v718 = vmul.f32 %v477, %v701
        %v720 = vlaneseq
        %v721 = vshrl.u32 %v720, 7
        %v722 = vsub.s32 0, %v721
        %v723 = vrot.slane %v702, %v722
        %v725 = vmul.f32 %v723, %v703
        %v726 = vmul.f32 %v723, %v704
        %v727 = vmul.f32 %v723, %v705
        %v728 = vmul.f32 %v723, %v706
        %v729 = vmul.f32 %v723, %v707
        %v730 = vmul.f32 %v723, %v708
        %v731 = vmul.f32 %v723, %v709
        %v732 = vmul.f32 %v723, %v710
        %v733 = vmul.f32 %v723, %v711
        %v734 = vmul.f32 %v723, %v712
        %v735 = vmul.f32 %v723, %v713
        %v736 = vmul.f32 %v723, %v714
        %v737 = vmul.f32 %v723, %v715
        %v738 = vmul.f32 %v723, %v716
        %v739 = vmul.f32 %v723, %v717
        %v740 = vmul.f32 %v723, %v718
        %v741 = vld [vmem:[%s2] sm:$0x1]
        %v743 = vlaneseq
        %v744 = vshrl.u32 %v743, 7
        %v745 = vsub.s32 0, %v744
        %v746 = vrot.slane %v741, %v745
        %v748 = vadd.f32 %v725, %v746
        %v749 = vadd.f32 %v726, %v746
        %v750 = vadd.f32 %v727, %v746
        %v751 = vadd.f32 %v728, %v746
        %v752 = vadd.f32 %v729, %v746
        %v753 = vadd.f32 %v730, %v746
        %v754 = vadd.f32 %v731, %v746
        %v755 = vadd.f32 %v732, %v746
        %v756 = vadd.f32 %v733, %v746
        %v757 = vadd.f32 %v734, %v746
        %v758 = vadd.f32 %v735, %v746
        %v759 = vadd.f32 %v736, %v746
        %v760 = vadd.f32 %v737, %v746
        %v761 = vadd.f32 %v738, %v746
        %v762 = vadd.f32 %v739, %v746
        %v763 = vadd.f32 %v740, %v746
        %v764 = vpack.c.bf16 %v749, %v748
        %v765 = vpack.c.bf16 %v751, %v750
        %v766 = vpack.c.bf16 %v753, %v752
        %v767 = vpack.c.bf16 %v755, %v754
        %v768 = vpack.c.bf16 %v757, %v756
        %v769 = vpack.c.bf16 %v759, %v758
        %v770 = vpack.c.bf16 %v761, %v760
        %v771 = vpack.c.bf16 %v763, %v762
        %v772 = vld [vmem:[#allocation5] sm:$0xff]
        %v773 = vld [vmem:[#allocation5 + $0x8] sm:$0xff]
        %v774 = vld [vmem:[#allocation5 + $0x10] sm:$0xff]
        %v775 = vld [vmem:[#allocation5 + $0x18] sm:$0xff]
        %v776 = vld [vmem:[#allocation5 + $0x20] sm:$0xff]
        %v777 = vld [vmem:[#allocation5 + $0x28] sm:$0xff]
        %v778 = vld [vmem:[#allocation5 + $0x30] sm:$0xff]
        %v779 = vld [vmem:[#allocation5 + $0x38] sm:$0xff]
        %v780 = vld [vmem:[#allocation5 + $0x40] sm:$0xff]
        %v781 = vld [vmem:[#allocation5 + $0x48] sm:$0xff]
        %v782 = vld [vmem:[#allocation5 + $0x50] sm:$0xff]
        %v783 = vld [vmem:[#allocation5 + $0x58] sm:$0xff]
        %v784 = vld [vmem:[#allocation5 + $0x60] sm:$0xff]
        %v785 = vld [vmem:[#allocation5 + $0x68] sm:$0xff]
        %v786 = vld [vmem:[#allocation5 + $0x70] sm:$0xff]
        %v787 = vld [vmem:[#allocation5 + $0x78] sm:$0xff]
        %v788 = vld [vmem:[%s4] sm:$0x3]
        %v790 = vlaneseq
        %v791 = vshrl.u32 %v790, 7
        %v792 = vsub.s32 0, %v791
        %v793 = vrot.slane %v788, %v792
        %v794 = vlaneseq
        %v795 = vshrl.u32 %v794, 7
        %v796 = vsub.s32 1, %v795
        %v797 = vrot.slane %v788, %v796
        %v816 = vunpack.c.l.b16 %v772
        %v817 = vunpack.c.h.b16 %v772
        %v818 = vunpack.c.l.b16 %v773
        %v819 = vunpack.c.h.b16 %v773
        %v820 = vunpack.c.l.b16 %v774
        %v821 = vunpack.c.h.b16 %v774
        %v822 = vunpack.c.l.b16 %v775
        %v823 = vunpack.c.h.b16 %v775
        %v824 = vunpack.c.l.b16 %v776
        %v825 = vunpack.c.h.b16 %v776
        %v826 = vunpack.c.l.b16 %v777
        %v827 = vunpack.c.h.b16 %v777
        %v828 = vunpack.c.l.b16 %v778
        %v829 = vunpack.c.h.b16 %v778
        %v830 = vunpack.c.l.b16 %v779
        %v831 = vunpack.c.h.b16 %v779
        %v832 = vunpack.c.l.b16 %v780
        %v833 = vunpack.c.h.b16 %v780
        %v834 = vunpack.c.l.b16 %v781
        %v835 = vunpack.c.h.b16 %v781
        %v836 = vunpack.c.l.b16 %v782
        %v837 = vunpack.c.h.b16 %v782
        %v838 = vunpack.c.l.b16 %v783
        %v839 = vunpack.c.h.b16 %v783
        %v840 = vunpack.c.l.b16 %v784
        %v841 = vunpack.c.h.b16 %v784
        %v842 = vunpack.c.l.b16 %v785
        %v843 = vunpack.c.h.b16 %v785
        %v844 = vunpack.c.l.b16 %v786
        %v845 = vunpack.c.h.b16 %v786
        %v846 = vunpack.c.l.b16 %v787
        %v847 = vunpack.c.h.b16 %v787
        %v848 = vpack.c.b16 %v818, %v816
        %v849 = vpack.c.b16 %v819, %v817
        %v850 = vpack.c.b16 %v822, %v820
        %v851 = vpack.c.b16 %v823, %v821
        %v852 = vpack.c.b16 %v826, %v824
        %v853 = vpack.c.b16 %v827, %v825
        %v854 = vpack.c.b16 %v830, %v828
        %v855 = vpack.c.b16 %v831, %v829
        %v856 = vpack.c.b16 %v834, %v832
        %v857 = vpack.c.b16 %v835, %v833
        %v858 = vpack.c.b16 %v838, %v836
        %v859 = vpack.c.b16 %v839, %v837
        %v860 = vpack.c.b16 %v842, %v840
        %v861 = vpack.c.b16 %v843, %v841
        %v862 = vpack.c.b16 %v846, %v844
        %v863 = vpack.c.b16 %v847, %v845
        %880 = vmatprep.subr.bf16.mxu0 %v849
        %881 = vmatpush1.bf16.msra.mxu0 %v848
        %882 = vmatprep.subr.bf16.mxu0 %v851
        %883 = vmatpush1.bf16.msra.mxu0 %v850
        %884 = vmatprep.subr.bf16.mxu0 %v853
        %885 = vmatpush1.bf16.msra.mxu0 %v852
        %886 = vmatprep.subr.bf16.mxu0 %v855
        %887 = vmatpush1.bf16.msra.mxu0 %v854
        %888 = vmatprep.subr.bf16.mxu0 %v857
        %889 = vmatpush1.bf16.msra.mxu0 %v856
        %890 = vmatprep.subr.bf16.mxu0 %v859
        %891 = vmatpush1.bf16.msra.mxu0 %v858
        %892 = vmatprep.subr.bf16.mxu0 %v861
        %893 = vmatpush1.bf16.msra.mxu0 %v860
        %894 = vmatprep.subr.bf16.mxu0 %v863
        %895 = vmatpush1.bf16.msra.mxu0 %v862
        %896 = vmatprep.subr.bf16.mxu0 0
        %897 = vmatpush1.bf16.msra.mxu0 0
        %898 = vmatprep.subr.bf16.mxu0 0
        %899 = vmatpush1.bf16.msra.mxu0 0
        %900 = vmatprep.subr.bf16.mxu0 0
        %901 = vmatpush1.bf16.msra.mxu0 0
        %902 = vmatprep.subr.bf16.mxu0 0
        %903 = vmatpush1.bf16.msra.mxu0 0
        %904 = vmatprep.subr.bf16.mxu0 0
        %905 = vmatpush1.bf16.msra.mxu0 0
        %906 = vmatprep.subr.bf16.mxu0 0
        %907 = vmatpush1.bf16.msra.mxu0 0
        %908 = vmatprep.subr.bf16.mxu0 0
        %909 = vmatpush1.bf16.msra.mxu0 0
        %910 = vmatprep.subr.bf16.mxu0 0
        %911 = vmatpush1.bf16.msra.mxu0 0
        %912 = vmatprep.mubr.bf16.mxu0 0
        %913 = vmatmul.mubr.bf16.gmra.mrb[0].mxu0 %v764
        %v914 = vpop.f32.mrb[0].mxu0
        %v915 = vadd.f32 %v793, %v914
        %v916 = vpop.f32.mrb[0].mxu0
        %v917 = vadd.f32 %v797, %v916
        %v918 = vpop.f32.mrb[0].mxu0
        %v919 = vadd.f32 %v793, %v918
        %v920 = vpop.f32.mrb[0].mxu0
        %v921 = vadd.f32 %v797, %v920
        %922 = vmatprep.mubr.bf16.mxu0 0
        %923 = vmatmul.mubr.bf16.gmra.mrb[0].mxu0 %v765
        %v924 = vpop.f32.mrb[0].mxu0
        %v925 = vadd.f32 %v793, %v924
        %v926 = vpop.f32.mrb[0].mxu0
        %v927 = vadd.f32 %v797, %v926
        %v928 = vpop.f32.mrb[0].mxu0
        %v929 = vadd.f32 %v793, %v928
        %v930 = vpop.f32.mrb[0].mxu0
        %v931 = vadd.f32 %v797, %v930
        %932 = vmatprep.mubr.bf16.mxu0 0
        %933 = vmatmul.mubr.bf16.gmra.mrb[0].mxu0 %v766
        %v934 = vpop.f32.mrb[0].mxu0
        %v935 = vadd.f32 %v793, %v934
        %v936 = vpop.f32.mrb[0].mxu0
        %v937 = vadd.f32 %v797, %v936
        %v938 = vpop.f32.mrb[0].mxu0
        %v939 = vadd.f32 %v793, %v938
        %v940 = vpop.f32.mrb[0].mxu0
        %v941 = vadd.f32 %v797, %v940
        %942 = vmatprep.mubr.bf16.mxu0 0
        %943 = vmatmul.mubr.bf16.gmra.mrb[0].mxu0 %v767
        %v944 = vpop.f32.mrb[0].mxu0
        %v945 = vadd.f32 %v793, %v944
        %v946 = vpop.f32.mrb[0].mxu0
        %v947 = vadd.f32 %v797, %v946
        %v948 = vpop.f32.mrb[0].mxu0
        %v949 = vadd.f32 %v793, %v948
        %v950 = vpop.f32.mrb[0].mxu0
        %v951 = vadd.f32 %v797, %v950
        %952 = vmatprep.mubr.bf16.mxu0 0
        %953 = vmatmul.mubr.bf16.gmra.mrb[0].mxu0 %v768
        %v954 = vpop.f32.mrb[0].mxu0
        %v955 = vadd.f32 %v793, %v954
        %v956 = vpop.f32.mrb[0].mxu0
        %v957 = vadd.f32 %v797, %v956
        %v958 = vpop.f32.mrb[0].mxu0
        %v959 = vadd.f32 %v793, %v958
        %v960 = vpop.f32.mrb[0].mxu0
        %v961 = vadd.f32 %v797, %v960
        %962 = vmatprep.mubr.bf16.mxu0 0
        %963 = vmatmul.mubr.bf16.gmra.mrb[0].mxu0 %v769
        %v964 = vpop.f32.mrb[0].mxu0
        %v965 = vadd.f32 %v793, %v964
        %v966 = vpop.f32.mrb[0].mxu0
        %v967 = vadd.f32 %v797, %v966
        %v968 = vpop.f32.mrb[0].mxu0
        %v969 = vadd.f32 %v793, %v968
        %v970 = vpop.f32.mrb[0].mxu0
        %v971 = vadd.f32 %v797, %v970
        %972 = vmatprep.mubr.bf16.mxu0 0
        %973 = vmatmul.mubr.bf16.gmra.mrb[0].mxu0 %v770
        %v974 = vpop.f32.mrb[0].mxu0
        %v975 = vadd.f32 %v793, %v974
        %v976 = vpop.f32.mrb[0].mxu0
        %v977 = vadd.f32 %v797, %v976
        %v978 = vpop.f32.mrb[0].mxu0
        %v979 = vadd.f32 %v793, %v978
        %v980 = vpop.f32.mrb[0].mxu0
        %v981 = vadd.f32 %v797, %v980
        %982 = vmatprep.mubr.bf16.mxu0 0
        %983 = vmatmul.mubr.bf16.gmra.mrb[0].mxu0 %v771
        %v984 = vpop.f32.mrb[0].mxu0
        %v985 = vadd.f32 %v793, %v984
        %v986 = vpop.f32.mrb[0].mxu0
        %v987 = vadd.f32 %v797, %v986
        %v988 = vpop.f32.mrb[0].mxu0
        %v989 = vadd.f32 %v793, %v988
        %v990 = vpop.f32.mrb[0].mxu0
        %v991 = vadd.f32 %v797, %v990
        %992 = vdwg.mxu0
        %v993 = vmax.f32 %v915, 0.0
        %v994 = vmax.f32 %v917, 0.0
        %v995 = vmax.f32 %v919, 0.0
        %v996 = vmax.f32 %v921, 0.0
        %v997 = vmax.f32 %v925, 0.0
        %v998 = vmax.f32 %v927, 0.0
        %v999 = vmax.f32 %v929, 0.0
        %v1000 = vmax.f32 %v931, 0.0
        %v1001 = vmax.f32 %v935, 0.0
        %v1002 = vmax.f32 %v937, 0.0
        %v1003 = vmax.f32 %v939, 0.0
        %v1004 = vmax.f32 %v941, 0.0
        %v1005 = vmax.f32 %v945, 0.0
        %v1006 = vmax.f32 %v947, 0.0
        %v1007 = vmax.f32 %v949, 0.0
        %v1008 = vmax.f32 %v951, 0.0
        %v1009 = vmax.f32 %v955, 0.0
        %v1010 = vmax.f32 %v957, 0.0
        %v1011 = vmax.f32 %v959, 0.0
        %v1012 = vmax.f32 %v961, 0.0
        %v1013 = vmax.f32 %v965, 0.0
        %v1014 = vmax.f32 %v967, 0.0
        %v1015 = vmax.f32 %v969, 0.0
        %v1016 = vmax.f32 %v971, 0.0
        %v1017 = vmax.f32 %v975, 0.0
        %v1018 = vmax.f32 %v977, 0.0
        %v1019 = vmax.f32 %v979, 0.0
        %v1020 = vmax.f32 %v981, 0.0
        %v1021 = vmax.f32 %v985, 0.0
        %v1022 = vmax.f32 %v987, 0.0
        %v1023 = vmax.f32 %v989, 0.0
        %v1024 = vmax.f32 %v991, 0.0
        %v1025 = vpack.c.bf16 %v995, %v993
        %v1026 = vpack.c.bf16 %v996, %v994
        %v1027 = vpack.c.bf16 %v999, %v997
        %v1028 = vpack.c.bf16 %v1000, %v998
        %v1029 = vpack.c.bf16 %v1003, %v1001
        %v1030 = vpack.c.bf16 %v1004, %v1002
        %v1031 = vpack.c.bf16 %v1007, %v1005
        %v1032 = vpack.c.bf16 %v1008, %v1006
        %v1033 = vpack.c.bf16 %v1011, %v1009
        %v1034 = vpack.c.bf16 %v1012, %v1010
        %v1035 = vpack.c.bf16 %v1015, %v1013
        %v1036 = vpack.c.bf16 %v1016, %v1014
        %v1037 = vpack.c.bf16 %v1019, %v1017
        %v1038 = vpack.c.bf16 %v1020, %v1018
        %v1039 = vpack.c.bf16 %v1023, %v1021
        %v1040 = vpack.c.bf16 %v1024, %v1022
        %v1041 = vld [vmem:[#allocation7] sm:$0xf]
        %v1042 = vld [vmem:[#allocation7 + $0x4] sm:$0xf]
        %v1043 = vld [vmem:[#allocation7 + $0x8] sm:$0xf]
        %v1044 = vld [vmem:[#allocation7 + $0xc] sm:$0xf]
        %v1045 = vld [vmem:[#allocation7 + $0x10] sm:$0xf]
        %v1046 = vld [vmem:[#allocation7 + $0x14] sm:$0xf]
        %v1047 = vld [vmem:[#allocation7 + $0x18] sm:$0xf]
        %v1048 = vld [vmem:[#allocation7 + $0x1c] sm:$0xf]
        %v1049 = vld [vmem:[#allocation7 + $0x20] sm:$0xf]
        %v1050 = vld [vmem:[#allocation7 + $0x24] sm:$0xf]
        %v1051 = vld [vmem:[#allocation7 + $0x28] sm:$0xf]
        %v1052 = vld [vmem:[#allocation7 + $0x2c] sm:$0xf]
        %v1053 = vld [vmem:[#allocation7 + $0x30] sm:$0xf]
        %v1054 = vld [vmem:[#allocation7 + $0x34] sm:$0xf]
        %v1055 = vld [vmem:[#allocation7 + $0x38] sm:$0xf]
        %v1056 = vld [vmem:[#allocation7 + $0x3c] sm:$0xf]
        %v1057 = vld [vmem:[#allocation7 + $0x40] sm:$0xf]
        %v1058 = vld [vmem:[#allocation7 + $0x44] sm:$0xf]
        %v1059 = vld [vmem:[#allocation7 + $0x48] sm:$0xf]
        %v1060 = vld [vmem:[#allocation7 + $0x4c] sm:$0xf]
        %v1061 = vld [vmem:[#allocation7 + $0x50] sm:$0xf]
        %v1062 = vld [vmem:[#allocation7 + $0x54] sm:$0xf]
        %v1063 = vld [vmem:[#allocation7 + $0x58] sm:$0xf]
        %v1064 = vld [vmem:[#allocation7 + $0x5c] sm:$0xf]
        %v1065 = vld [vmem:[#allocation7 + $0x60] sm:$0xf]
        %v1066 = vld [vmem:[#allocation7 + $0x64] sm:$0xf]
        %v1067 = vld [vmem:[#allocation7 + $0x68] sm:$0xf]
        %v1068 = vld [vmem:[#allocation7 + $0x6c] sm:$0xf]
        %v1069 = vld [vmem:[#allocation7 + $0x70] sm:$0xf]
        %v1070 = vld [vmem:[#allocation7 + $0x74] sm:$0xf]
        %v1071 = vld [vmem:[#allocation7 + $0x78] sm:$0xf]
        %v1072 = vld [vmem:[#allocation7 + $0x7c] sm:$0xf]
        %v1073 = vld [vmem:[%s6] sm:$0x1]
        %v1075 = vlaneseq
        %v1076 = vshrl.u32 %v1075, 7
        %v1077 = vsub.s32 0, %v1076
        %v1078 = vrot.slane %v1073, %v1077
        %v1112 = vunpack.c.l.b16 %v1041
        %v1113 = vunpack.c.l.b16 %v1042
        %v1114 = vunpack.c.l.b16 %v1043
        %v1115 = vunpack.c.l.b16 %v1044
        %v1116 = vunpack.c.l.b16 %v1045
        %v1117 = vunpack.c.l.b16 %v1046
        %v1118 = vunpack.c.l.b16 %v1047
        %v1119 = vunpack.c.l.b16 %v1048
        %v1120 = vunpack.c.l.b16 %v1049
        %v1121 = vunpack.c.l.b16 %v1050
        %v1122 = vunpack.c.l.b16 %v1051
        %v1123 = vunpack.c.l.b16 %v1052
        %v1124 = vunpack.c.l.b16 %v1053
        %v1125 = vunpack.c.l.b16 %v1054
        %v1126 = vunpack.c.l.b16 %v1055
        %v1127 = vunpack.c.l.b16 %v1056
        %v1128 = vunpack.c.l.b16 %v1057
        %v1129 = vunpack.c.l.b16 %v1058
        %v1130 = vunpack.c.l.b16 %v1059
        %v1131 = vunpack.c.l.b16 %v1060
        %v1132 = vunpack.c.l.b16 %v1061
        %v1133 = vunpack.c.l.b16 %v1062
        %v1134 = vunpack.c.l.b16 %v1063
        %v1135 = vunpack.c.l.b16 %v1064
        %v1136 = vunpack.c.l.b16 %v1065
        %v1137 = vunpack.c.l.b16 %v1066
        %v1138 = vunpack.c.l.b16 %v1067
        %v1139 = vunpack.c.l.b16 %v1068
        %v1140 = vunpack.c.l.b16 %v1069
        %v1141 = vunpack.c.l.b16 %v1070
        %v1142 = vunpack.c.l.b16 %v1071
        %v1143 = vunpack.c.l.b16 %v1072
        %v1144 = vpack.c.b16 %v1113, %v1112
        %v1145 = vpack.c.b16 %v1115, %v1114
        %v1146 = vpack.c.b16 %v1117, %v1116
        %v1147 = vpack.c.b16 %v1119, %v1118
        %v1148 = vpack.c.b16 %v1121, %v1120
        %v1149 = vpack.c.b16 %v1123, %v1122
        %v1150 = vpack.c.b16 %v1125, %v1124
        %v1151 = vpack.c.b16 %v1127, %v1126
        %v1152 = vpack.c.b16 %v1129, %v1128
        %v1153 = vpack.c.b16 %v1131, %v1130
        %v1154 = vpack.c.b16 %v1133, %v1132
        %v1155 = vpack.c.b16 %v1135, %v1134
        %v1156 = vpack.c.b16 %v1137, %v1136
        %v1157 = vpack.c.b16 %v1139, %v1138
        %v1158 = vpack.c.b16 %v1141, %v1140
        %v1159 = vpack.c.b16 %v1143, %v1142
        %1176 = vmatprep.subr.bf16.mxu0 0
        %1177 = vmatpush1.bf16.msra.mxu0 %v1144
        %1178 = vmatprep.subr.bf16.mxu0 0
        %1179 = vmatpush1.bf16.msra.mxu0 %v1145
        %1180 = vmatprep.subr.bf16.mxu0 0
        %1181 = vmatpush1.bf16.msra.mxu0 %v1146
        %1182 = vmatprep.subr.bf16.mxu0 0
        %1183 = vmatpush1.bf16.msra.mxu0 %v1147
        %1184 = vmatprep.subr.bf16.mxu0 0
        %1185 = vmatpush1.bf16.msra.mxu0 %v1148
        %1186 = vmatprep.subr.bf16.mxu0 0
        %1187 = vmatpush1.bf16.msra.mxu0 %v1149
        %1188 = vmatprep.subr.bf16.mxu0 0
        %1189 = vmatpush1.bf16.msra.mxu0 %v1150
        %1190 = vmatprep.subr.bf16.mxu0 0
        %1191 = vmatpush1.bf16.msra.mxu0 %v1151
        %1192 = vmatprep.subr.bf16.mxu0 0
        %1193 = vmatpush1.bf16.msra.mxu0 %v1152
        %1194 = vmatprep.subr.bf16.mxu0 0
        %1195 = vmatpush1.bf16.msra.mxu0 %v1153
        %1196 = vmatprep.subr.bf16.mxu0 0
        %1197 = vmatpush1.bf16.msra.mxu0 %v1154
        %1198 = vmatprep.subr.bf16.mxu0 0
        %1199 = vmatpush1.bf16.msra.mxu0 %v1155
        %1200 = vmatprep.subr.bf16.mxu0 0
        %1201 = vmatpush1.bf16.msra.mxu0 %v1156
        %1202 = vmatprep.subr.bf16.mxu0 0
        %1203 = vmatpush1.bf16.msra.mxu0 %v1157
        %1204 = vmatprep.subr.bf16.mxu0 0
        %1205 = vmatpush1.bf16.msra.mxu0 %v1158
        %1206 = vmatprep.subr.bf16.mxu0 0
        %1207 = vmatpush1.bf16.msra.mxu0 %v1159
        %1208 = vmatprep.mubr.bf16.mxu0 %v1026
        %1209 = vmatmul.mubr.bf16.gmra.mrb[0].mxu0 %v1025
        %v1210 = vpop.f32.mrb[0].mxu0
        %v1211 = vadd.f32 %v1078, %v1210
        %v1212 = vpop.f32.mrb[0].mxu0
        %v1213 = vpop.f32.mrb[0].mxu0
        %v1214 = vadd.f32 %v1078, %v1213
        %v1215 = vpop.f32.mrb[0].mxu0
        %1216 = vmatprep.mubr.bf16.mxu0 %v1028
        %1217 = vmatmul.mubr.bf16.gmra.mrb[0].mxu0 %v1027
        %v1218 = vpop.f32.mrb[0].mxu0
        %v1219 = vadd.f32 %v1078, %v1218
        %v1220 = vpop.f32.mrb[0].mxu0
        %v1221 = vpop.f32.mrb[0].mxu0
        %v1222 = vadd.f32 %v1078, %v1221
        %v1223 = vpop.f32.mrb[0].mxu0
        %1224 = vmatprep.mubr.bf16.mxu0 %v1030
        %1225 = vmatmul.mubr.bf16.gmra.mrb[0].mxu0 %v1029
        %v1226 = vpop.f32.mrb[0].mxu0
        %v1227 = vadd.f32 %v1078, %v1226
        %v1228 = vpop.f32.mrb[0].mxu0
        %v1229 = vpop.f32.mrb[0].mxu0
        %v1230 = vadd.f32 %v1078, %v1229
        %v1231 = vpop.f32.mrb[0].mxu0
        %1232 = vmatprep.mubr.bf16.mxu0 %v1032
        %1233 = vmatmul.mubr.bf16.gmra.mrb[0].mxu0 %v1031
        %v1234 = vpop.f32.mrb[0].mxu0
        %v1235 = vadd.f32 %v1078, %v1234
        %v1236 = vpop.f32.mrb[0].mxu0
        %v1237 = vpop.f32.mrb[0].mxu0
        %v1238 = vadd.f32 %v1078, %v1237
        %v1239 = vpop.f32.mrb[0].mxu0
        %1240 = vmatprep.mubr.bf16.mxu0 %v1034
        %1241 = vmatmul.mubr.bf16.gmra.mrb[0].mxu0 %v1033
        %v1242 = vpop.f32.mrb[0].mxu0
        %v1243 = vadd.f32 %v1078, %v1242
        %v1244 = vpop.f32.mrb[0].mxu0
        %v1245 = vpop.f32.mrb[0].mxu0
        %v1246 = vadd.f32 %v1078, %v1245
        %v1247 = vpop.f32.mrb[0].mxu0
        %1248 = vmatprep.mubr.bf16.mxu0 %v1036
        %1249 = vmatmul.mubr.bf16.gmra.mrb[0].mxu0 %v1035
        %v1250 = vpop.f32.mrb[0].mxu0
        %v1251 = vadd.f32 %v1078, %v1250
        %v1252 = vpop.f32.mrb[0].mxu0
        %v1253 = vpop.f32.mrb[0].mxu0
        %v1254 = vadd.f32 %v1078, %v1253
        %v1255 = vpop.f32.mrb[0].mxu0
        %1256 = vmatprep.mubr.bf16.mxu0 %v1038
        %1257 = vmatmul.mubr.bf16.gmra.mrb[0].mxu0 %v1037
        %v1258 = vpop.f32.mrb[0].mxu0
        %v1259 = vadd.f32 %v1078, %v1258
        %v1260 = vpop.f32.mrb[0].mxu0
        %v1261 = vpop.f32.mrb[0].mxu0
        %v1262 = vadd.f32 %v1078, %v1261
        %v1263 = vpop.f32.mrb[0].mxu0
        %1264 = vmatprep.mubr.bf16.mxu0 %v1040
        %1265 = vmatmul.mubr.bf16.gmra.mrb[0].mxu0 %v1039
        %v1266 = vpop.f32.mrb[0].mxu0
        %v1267 = vadd.f32 %v1078, %v1266
        %v1268 = vpop.f32.mrb[0].mxu0
        %v1269 = vpop.f32.mrb[0].mxu0
        %v1270 = vadd.f32 %v1078, %v1269
        %v1271 = vpop.f32.mrb[0].mxu0
        %1272 = vdwg.mxu0
        %v1273 = vld [vmem:[%s355] sm:$0xff]
        %v1274 = vld [vmem:[%s355 + $0x8] sm:$0xff]
        %v1275 = vld [vmem:[%s355 + $0x10] sm:$0xff]
        %v1276 = vld [vmem:[%s355 + $0x18] sm:$0xff]
        %v1277 = vld [vmem:[%s355 + $0x20] sm:$0xff]
        %v1278 = vld [vmem:[%s355 + $0x28] sm:$0xff]
        %v1279 = vld [vmem:[%s355 + $0x30] sm:$0xff]
        %v1280 = vld [vmem:[%s355 + $0x38] sm:$0xff]
        %v1281 = vld [vmem:[%s355 + $0x40] sm:$0xff]
        %v1282 = vld [vmem:[%s355 + $0x48] sm:$0xff]
        %v1283 = vld [vmem:[%s355 + $0x50] sm:$0xff]
        %v1284 = vld [vmem:[%s355 + $0x58] sm:$0xff]
        %v1285 = vld [vmem:[%s355 + $0x60] sm:$0xff]
        %v1286 = vld [vmem:[%s355 + $0x68] sm:$0xff]
        %v1287 = vld [vmem:[%s355 + $0x70] sm:$0xff]
        %v1288 = vld [vmem:[%s355 + $0x78] sm:$0xff]
        %vm1289 = vcmp.ge.s32.totalorder %v1273, 2576980378
        %vm1290 = vcmp.ge.s32.totalorder %v1274, 2576980378
        %vm1291 = vcmp.ge.s32.totalorder %v1275, 2576980378
        %vm1292 = vcmp.ge.s32.totalorder %v1276, 2576980378
        %vm1293 = vcmp.ge.s32.totalorder %v1277, 2576980378
        %vm1294 = vcmp.ge.s32.totalorder %v1278, 2576980378
        %vm1295 = vcmp.ge.s32.totalorder %v1279, 2576980378
        %vm1296 = vcmp.ge.s32.totalorder %v1280, 2576980378
        %vm1297 = vcmp.ge.s32.totalorder %v1281, 2576980378
        %vm1298 = vcmp.ge.s32.totalorder %v1282, 2576980378
        %vm1299 = vcmp.ge.s32.totalorder %v1283, 2576980378
        %vm1300 = vcmp.ge.s32.totalorder %v1284, 2576980378
        %vm1301 = vcmp.ge.s32.totalorder %v1285, 2576980378
        %vm1302 = vcmp.ge.s32.totalorder %v1286, 2576980378
        %vm1303 = vcmp.ge.s32.totalorder %v1287, 2576980378
        %vm1304 = vcmp.ge.s32.totalorder %v1288, 2576980378
        %v1305 = vmul.f32 %v1211, 1.1111112
        %v1306 = vmul.f32 %v1214, 1.1111112
        %v1307 = vmul.f32 %v1219, 1.1111112
        %v1308 = vmul.f32 %v1222, 1.1111112
        %v1309 = vmul.f32 %v1227, 1.1111112
        %v1310 = vmul.f32 %v1230, 1.1111112
        %v1311 = vmul.f32 %v1235, 1.1111112
        %v1312 = vmul.f32 %v1238, 1.1111112
        %v1313 = vmul.f32 %v1243, 1.1111112
        %v1314 = vmul.f32 %v1246, 1.1111112
        %v1315 = vmul.f32 %v1251, 1.1111112
        %v1316 = vmul.f32 %v1254, 1.1111112
        %v1317 = vmul.f32 %v1259, 1.1111112
        %v1318 = vmul.f32 %v1262, 1.1111112
        %v1319 = vmul.f32 %v1267, 1.1111112
        %v1320 = vmul.f32 %v1270, 1.1111112
        %v1321 = vsel %vm1289, %v1305, 0.0
        %v1322 = vsel %vm1290, %v1306, 0.0
        %v1323 = vsel %vm1291, %v1307, 0.0
        %v1324 = vsel %vm1292, %v1308, 0.0
        %v1325 = vsel %vm1293, %v1309, 0.0
        %v1326 = vsel %vm1294, %v1310, 0.0
        %v1327 = vsel %vm1295, %v1311, 0.0
        %v1328 = vsel %vm1296, %v1312, 0.0
        %v1329 = vsel %vm1297, %v1313, 0.0
        %v1330 = vsel %vm1298, %v1314, 0.0
        %v1331 = vsel %vm1299, %v1315, 0.0
        %v1332 = vsel %vm1300, %v1316, 0.0
        %v1333 = vsel %vm1301, %v1317, 0.0
        %v1334 = vsel %vm1302, %v1318, 0.0
        %v1335 = vsel %vm1303, %v1319, 0.0
        %v1336 = vsel %vm1304, %v1320, 0.0
        %v1337 = vadd.f32 %v397, %v1321
        %v1338 = vadd.f32 %v398, %v1322
        %v1339 = vadd.f32 %v399, %v1323
        %v1340 = vadd.f32 %v400, %v1324
        %v1341 = vadd.f32 %v401, %v1325
        %v1342 = vadd.f32 %v402, %v1326
        %v1343 = vadd.f32 %v403, %v1327
        %v1344 = vadd.f32 %v404, %v1328
        %v1345 = vadd.f32 %v405, %v1329
        %v1346 = vadd.f32 %v406, %v1330
        %v1347 = vadd.f32 %v407, %v1331
        %v1348 = vadd.f32 %v408, %v1332
        %v1349 = vadd.f32 %v409, %v1333
        %v1350 = vadd.f32 %v410, %v1334
        %v1351 = vadd.f32 %v411, %v1335
        %v1352 = vadd.f32 %v412, %v1336
        %1353 = vst [vmem:[%s392] sm:$0xff] %v1337
        %1354 = vst [vmem:[%s392 + $0x8] sm:$0xff] %v1338
        %1355 = vst [vmem:[%s392 + $0x10] sm:$0xff] %v1339
        %1356 = vst [vmem:[%s392 + $0x18] sm:$0xff] %v1340
        %1357 = vst [vmem:[%s392 + $0x20] sm:$0xff] %v1341
        %1358 = vst [vmem:[%s392 + $0x28] sm:$0xff] %v1342
        %1359 = vst [vmem:[%s392 + $0x30] sm:$0xff] %v1343
        %1360 = vst [vmem:[%s392 + $0x38] sm:$0xff] %v1344
        %1361 = vst [vmem:[%s392 + $0x40] sm:$0xff] %v1345
        %1362 = vst [vmem:[%s392 + $0x48] sm:$0xff] %v1346
        %1363 = vst [vmem:[%s392 + $0x50] sm:$0xff] %v1347
        %1364 = vst [vmem:[%s392 + $0x58] sm:$0xff] %v1348
        %1365 = vst [vmem:[%s392 + $0x60] sm:$0xff] %v1349
        %1366 = vst [vmem:[%s392 + $0x68] sm:$0xff] %v1350
        %1367 = vst [vmem:[%s392 + $0x70] sm:$0xff] %v1351
        %1368 = vst [vmem:[%s392 + $0x78] sm:$0xff] %v1352
        %s1369 = sand.u32 %s215, 1
        %s1370 = scalar_lea.sflag [#allocation4], %s1369
        %s1371 = sand.u32 %s215, 1
        %s1372 = smul.addr %s1371, 128
        %s1373 = scalar_lea.vmem [#allocation10], %s1372
        // Predicated region
        $region69: #{tpu_custom_call.1} parent=51 // pred_check
          %p1374 = pneg %p225
        $region70: #{tpu_custom_call.1} parent=51 // pred_check_branch
          %1376 = sbr.rel (%p1374) target = $region72
        $region71: #{tpu_custom_call.1} parent=51 // pred_region
          %s1377 = smul.u32 16, %s29
          %s1379 = ssub.s32 2048, 2048
          %1380 = vsyncadd %s1370, %s1379
          %s1381 = smul.addr %s1377, 128
          %s1382 = scalar_lea.hbm %s8, %s1381
          %s1383 = sshll.u32 %s1373, 4
          %s1384 = int_to_ptr.vmem [resolvable:$true] %s1383
          %1389 = dma.vmem_to_hbm [thread:$0]  %s1384, 2048, %s1382, %s1370, 128, 128, 8
        $region72: #{tpu_custom_call.1} parent=51 // pred_fallthru
          _
      $region52: #{tpu_custom_call.1} parent=5 // pred_fallthru
        _
      %p1390 = scmp.le.s32.totalorder 2, %s24
      // Predicated region
      $region73: #{tpu_custom_call.1} parent=5 // pred_check
        %p1391 = pneg %p1390
      $region74: #{tpu_custom_call.1} parent=5 // pred_check_branch
        %1393 = sbr.rel (%p1391) target = $region76
      $region75: #{tpu_custom_call.1} parent=5 // pred_region
        %s1394 = ssub.s32 %s24, 2
        // Predicated region
        $region77: #{tpu_custom_call.1} parent=75 // pred_check
          %p1395 = pneg %p231
        $region78: #{tpu_custom_call.1} parent=75 // pred_check_branch
          %1397 = sbr.rel (%p1395) target = $region80
        $region79: #{tpu_custom_call.1} parent=75 // pred_region
          %s1398 = sand.u32 %s216, 1
          %s1399 = scalar_lea.sflag [#allocation4], %s1398
          %s1400 = sand.u32 %s216, 1
          %s1401 = smul.addr %s1400, 128
          %s1402 = scalar_lea.vmem [#allocation10], %s1401
          %1403 = dma.done %s1399, 2048
        $region80: #{tpu_custom_call.1} parent=75 // pred_fallthru
          _
      $region76: #{tpu_custom_call.1} parent=5 // pred_fallthru
        _
    $region6: #{tpu_custom_call.1} parent=1 // loop_footer
      %s28 = sadd.s32 1, %s24
    $region7: #{tpu_custom_call.1} parent=1 // loop_footer_branch
      %23 = sbr.rel target = $region3
    $region8: #{tpu_custom_call.1} parent=1 // loop_exit
      _
    %1404 = vsyncpa [#allocation3], 1
    %s1405 = scalar_lea.sflag [#allocation3], 1
    %1406 = vsyncpa %s1405, 1
    %1407 = vsyncpa [#allocation6], 1
    %1408 = vsyncpa [#allocation9], 1
    %s1409 = scalar_lea.sflag [#allocation9], 1
    %1410 = vsyncpa %s1409, 1
    %1411 = vsyncpa [#allocation4], 1
    %s1412 = scalar_lea.sflag [#allocation4], 1
    %1413 = vsyncpa %s1412, 1

</llo_original>
